<compile_context>
chip_gen: v7x
topology: tpu7x:2x2x1
jax: 0.10.0
libtpu: 0.0.40
codegen_flags: <defaults>
</compile_context>

<pallas_src>
import math
from functools import partial

import jax
import jax.numpy as jnp
from jax.experimental import pallas as pl
from jax.experimental.pallas import tpu as pltpu

D = 2            # point dimensionality (module contract: x is (n, 2))
K = 8            # number of mixture components
LANE = 128       # lane width
MAX_TN = 32768   # max points per grid step (lane-dense tile width)


def gmm_energy_kernel(xt_ref, a_ref, mu_ref, c_ref, out_ref, *, use_bf16_exp=False):
    """One tile of points -> negative GMM log-likelihood.

    xt_ref : (D, TN)  f32   points, transposed (coords on sublanes)
    a_ref  : (K, D)   f32   -0.5 / sigma^2
    mu_ref : (K, D)   f32   component means
    c_ref  : (K, 1)   f32   log pi_k - sum_d log sigma_kd - D/2*log(2*pi)
    out_ref: (1, TN)  f32   energy = -log_prob (lane-dense)
    """
    k = a_ref.shape[0]
    tn = xt_ref.shape[1]
    a = a_ref[...]                            # (K, D)
    mu = mu_ref[...]                          # (K, D)

    # Sublane-broadcast each coordinate exactly once and reuse the result
    # (JAX doesn't CSE broadcast_in_dim; implicit broadcasting inside the
    # expression would re-broadcast per use).
    x0 = jnp.broadcast_to(xt_ref[0:1, :], (k, tn))     # (K, TN)
    x1 = jnp.broadcast_to(xt_ref[1:2, :], (k, tn))     # (K, TN)

    # (x - mu)^2 form: same VALU count as a*x^2+b*x, no cancellation near means.
    d0 = x0 - mu[:, 0:1]
    d1 = x1 - mu[:, 1:2]
    logits = c_ref[...] + a[:, 0:1] * (d0 * d0) + a[:, 1:2] * (d1 * d1)   # (K, TN)

    # Numerically stable logsumexp over the component (sublane) axis -> XLU.
    m = jnp.max(logits, axis=0, keepdims=True)          # (1, TN)
    z = logits - m
    if use_bf16_exp:
        # v6e/v7x only (bf16 EUP). ~4e-3 abs error in lse; keep off on v5e.
        e = jnp.exp(z.astype(jnp.bfloat16)).astype(jnp.float32)
    else:
        e = jnp.exp(z)
    s = jnp.sum(e, axis=0, keepdims=True)                # (1, TN)
    out_ref[...] = -(m + jnp.log(s))                     # (1, TN)


def _tile_plan(n):
    """Evenly sized lane tiles with < 128*num_tiles points of padding."""
    n128 = pl.cdiv(n, LANE) * LANE
    num_tiles = pl.cdiv(n128, MAX_TN)
    if n128 >= 2 * LANE:
        num_tiles = max(num_tiles, 2)       # keep both v7x TensorCores busy
    if num_tiles > 1 and num_tiles % 2:
        num_tiles += 1                      # even grid for the 2-TC split
    tn = pl.cdiv(pl.cdiv(n128, num_tiles), LANE) * LANE
    return num_tiles, tn


@partial(jax.jit, static_argnames=("use_bf16_exp",))
def energy_model_forward_t(xt, a, mu, c, *, use_bf16_exp=False):
    """xt: (2, N) f32 (pre-transposed layout) -> energy: (N,) f32."""
    n = xt.shape[1]
    num_tiles, tn = _tile_plan(n)
    n_pad = num_tiles * tn

    xt = xt.astype(jnp.float32)
    if n_pad != n:
        xt = jnp.pad(xt, ((0, 0), (0, n_pad - n)))       # ragged tail only

    kernel = partial(gmm_energy_kernel, use_bf16_exp=use_bf16_exp)
    out = pl.pallas_call(
        kernel,
        out_shape=jax.ShapeDtypeStruct((1, n_pad), jnp.float32),
        grid=(num_tiles,),
        in_specs=[
            pl.BlockSpec((D, tn), lambda i: (0, i)),     # x tile (transposed)
            pl.BlockSpec((K, D), lambda i: (0, 0)),      # a (resident)
            pl.BlockSpec((K, D), lambda i: (0, 0)),      # mu (resident)
            pl.BlockSpec((K, 1), lambda i: (0, 0)),      # c (resident)
        ],
        out_specs=pl.BlockSpec((1, tn), lambda i: (0, i)),   # lane-dense out
        compiler_params=pltpu.CompilerParams(
            dimension_semantics=("parallel",)),
    )(xt, a, mu, c)

    # Padded tail entries out[0, n:] contain garbage energies; slice them off.
    return out[0, :n]


@partial(jax.jit, static_argnames=("use_bf16_exp",))
def energy_model_forward(x, a, mu, c, *, use_bf16_exp=False):
    """Module contract: x is (n, 2) -> energy (n,) == -gmm.log_prob(x)."""
    # The transpose to the kernel's (D, N) layout is one fused XLA pass here;
    # callers that already hold x as (2, N) should call energy_model_forward_t.
    return energy_model_forward_t(x.astype(jnp.float32).T, a, mu, c,
                                  use_bf16_exp=use_bf16_exp)


def build_gmm_params(key):
    """Deterministic diagonal-GMM parameters (stands in for the torch gmm)."""
    k_logits, k_mu, k_sig = jax.random.split(key, 3)
    mix_logits = jax.random.normal(k_logits, (K,), jnp.float32)
    log_pi = jax.nn.log_softmax(mix_logits)
    mu = 3.0 * jax.random.normal(k_mu, (K, D), jnp.float32)
    sigma = 0.5 + jax.random.uniform(k_sig, (K, D), jnp.float32)   # > 0
    return mu, sigma, log_pi


def precompute_gmm_coeffs(mu, sigma, log_pi):
    """Host-side coefficients for the in-kernel (x - mu)^2 form."""
    a = (-0.5 / (sigma * sigma)).astype(jnp.float32)                # (K, D)
    c = (log_pi
         - jnp.sum(jnp.log(sigma), axis=-1)
         - 0.5 * D * math.log(2.0 * math.pi)
         ).reshape(K, 1).astype(jnp.float32)                        # (K, 1)
    return a, mu.astype(jnp.float32), c


def energy_reference(x, mu, sigma, log_pi):
    """Pure-JAX reference of MixtureSameFamily(diagonal-Normal).log_prob."""
    diff = x[:, None, :] - mu[None, :, :]                            # (N, K, D)
    log_comp = jnp.sum(
        -0.5 * (diff / sigma[None]) ** 2
        - jnp.log(sigma[None])
        - 0.5 * math.log(2.0 * math.pi),
        axis=-1)                                                     # (N, K)
    return -jax.scipy.special.logsumexp(log_comp + log_pi[None, :], axis=-1)


# TODO(synk): EnergyModel.grad uses torch.autograd; outside the kernel this is
# jax.grad(lambda x: energy_model_forward(x, a, mu, c).sum()) and is not part
# of the forward pass implemented here.


if __name__ == "__main__":
    key = jax.random.PRNGKey(0)
    k_params, k_x1, k_x2, k_x3, k_x4 = jax.random.split(key, 5)

    mu, sigma, log_pi = build_gmm_params(k_params)
    a, mu32, c = precompute_gmm_coeffs(mu, sigma, log_pi)

    def check(n, k_x):
        x = 4.0 * jax.random.normal(k_x, (n, D), jnp.float32)
        energy = jax.block_until_ready(energy_model_forward(x, a, mu32, c))
        ref = energy_reference(x, mu, sigma, log_pi)
        assert energy.shape == (n,)
        tol = 1e-3 + 1e-4 * float(jnp.max(jnp.abs(ref)))
        err = float(jnp.max(jnp.abs(energy - ref)))
        assert err < tol, f"mismatch vs. JAX reference: {err} >= {tol}"

    check(100, k_x1)      # single-tile path (grid = 1)
    check(200, k_x2)      # two small even tiles (v7x 2-TC split)
    check(9001, k_x3)     # ragged -> 2 x 4608 tiles, <= 215 padded points
    check(70001, k_x4)    # > MAX_TN -> 4 evenly sized tiles (even grid)

    print("KERNEL_OK")
</pallas_src>

<mosaic_0001>
module attributes {stable_mosaic.version = 11 : i64} {
  func.func @gmm_energy_kernel(%arg0: i32, %arg1: memref<2x128xf32, #tpu.memory_space<vmem>>, %arg2: memref<8x2xf32, #tpu.memory_space<vmem>>, %arg3: memref<8x2xf32, #tpu.memory_space<vmem>>, %arg4: memref<8x1xf32, #tpu.memory_space<vmem>>, %arg5: memref<1x128xf32, #tpu.memory_space<vmem>>) attributes {dimension_semantics = [#tpu.dimension_semantics<parallel>], iteration_bounds = array<i64: 1>, scalar_prefetch = 0 : i64, scratch_operands = 0 : i64, tpu.core_type = #tpu.core_type<tc>, window_params = [{transform_indices = @transform_0, window_bounds = array<i64: 2, 128>}, {pipeline_mode = #tpu.pipeline_mode<synchronous>, transform_indices = @transform_1, window_bounds = array<i64: 8, 2>}, {pipeline_mode = #tpu.pipeline_mode<synchronous>, transform_indices = @transform_2, window_bounds = array<i64: 8, 2>}, {pipeline_mode = #tpu.pipeline_mode<synchronous>, transform_indices = @transform_3, window_bounds = array<i64: 8, 1>}, {transform_indices = @transform_4, window_bounds = array<i64: 1, 128>}]} {
    %c0 = arith.constant 0 : index
    %c0_0 = arith.constant 0 : index
    %0 = vector.load %arg2[%c0, %c0_0] : memref<8x2xf32, #tpu.memory_space<vmem>>, vector<8x2xf32>
    %c0_1 = arith.constant 0 : index
    %c0_2 = arith.constant 0 : index
    %1 = vector.load %arg3[%c0_1, %c0_2] : memref<8x2xf32, #tpu.memory_space<vmem>>, vector<8x2xf32>
    %c0_3 = arith.constant 0 : index
    %c0_4 = arith.constant 0 : index
    %2 = vector.load %arg1[%c0_3, %c0_4] : memref<2x128xf32, #tpu.memory_space<vmem>>, vector<1x128xf32>
    %3 = vector.shape_cast %2 : vector<1x128xf32> to vector<1x128xf32>
    %4 = vector.broadcast %3 : vector<1x128xf32> to vector<8x128xf32>
    %c1 = arith.constant 1 : index
    %c0_5 = arith.constant 0 : index
    %5 = vector.load %arg1[%c1, %c0_5] : memref<2x128xf32, #tpu.memory_space<vmem>>, vector<1x128xf32>
    %6 = vector.shape_cast %5 : vector<1x128xf32> to vector<1x128xf32>
    %7 = vector.broadcast %6 : vector<1x128xf32> to vector<8x128xf32>
    %8 = vector.extract_strided_slice %1 {offsets = [0, 0], sizes = [8, 1], strides = [1, 1]} : vector<8x2xf32> to vector<8x1xf32>
    %9 = vector.broadcast %8 : vector<8x1xf32> to vector<8x128xf32>
    %10 = arith.subf %4, %9 : vector<8x128xf32>
    %11 = vector.extract_strided_slice %1 {offsets = [0, 1], sizes = [8, 1], strides = [1, 1]} : vector<8x2xf32> to vector<8x1xf32>
    %12 = vector.broadcast %11 : vector<8x1xf32> to vector<8x128xf32>
    %13 = arith.subf %7, %12 : vector<8x128xf32>
    %c0_6 = arith.constant 0 : index
    %c0_7 = arith.constant 0 : index
    %14 = vector.load %arg4[%c0_6, %c0_7] : memref<8x1xf32, #tpu.memory_space<vmem>>, vector<8x1xf32>
    %15 = vector.extract_strided_slice %0 {offsets = [0, 0], sizes = [8, 1], strides = [1, 1]} : vector<8x2xf32> to vector<8x1xf32>
    %16 = arith.mulf %10, %10 : vector<8x128xf32>
    %17 = vector.broadcast %15 : vector<8x1xf32> to vector<8x128xf32>
    %18 = arith.mulf %17, %16 : vector<8x128xf32>
    %19 = vector.broadcast %14 : vector<8x1xf32> to vector<8x128xf32>
    %20 = arith.addf %19, %18 : vector<8x128xf32>
    %21 = vector.extract_strided_slice %0 {offsets = [0, 1], sizes = [8, 1], strides = [1, 1]} : vector<8x2xf32> to vector<8x1xf32>
    %22 = arith.mulf %13, %13 : vector<8x128xf32>
    %23 = vector.broadcast %21 : vector<8x1xf32> to vector<8x128xf32>
    %24 = arith.mulf %23, %22 : vector<8x128xf32>
    %25 = arith.addf %20, %24 : vector<8x128xf32>
    %cst = arith.constant dense<0xFF800000> : vector<128xf32>
    %26 = vector.multi_reduction <maximumf>, %25, %cst [0] : vector<8x128xf32> to vector<128xf32>
    %27 = vector.shape_cast %26 : vector<128xf32> to vector<1x128xf32>
    %28 = vector.broadcast %27 : vector<1x128xf32> to vector<8x128xf32>
    %29 = arith.subf %25, %28 : vector<8x128xf32>
    %30 = math.exp %29 : vector<8x128xf32>
    %cst_8 = arith.constant dense<0.000000e+00> : vector<128xf32>
    %31 = vector.multi_reduction <add>, %30, %cst_8 [0] : vector<8x128xf32> to vector<128xf32>
    %32 = vector.shape_cast %31 : vector<128xf32> to vector<1x128xf32>
    %33 = math.log %32 : vector<1x128xf32>
    %34 = arith.addf %27, %33 : vector<1x128xf32>
    %cst_9 = arith.constant 0.000000e+00 : f32
    %35 = vector.broadcast %cst_9 : f32 to vector<1x128xf32>
    %36 = arith.subf %35, %34 : vector<1x128xf32>
    %c0_10 = arith.constant 0 : index
    %c0_11 = arith.constant 0 : index
    %37 = vector.load %arg5[%c0_10, %c0_11] : memref<1x128xf32, #tpu.memory_space<vmem>>, vector<1x128xf32>
    tpu.vector_store %arg5[%c0_10, %c0_11], %36 {strides = array<i32>} : memref<1x128xf32, #tpu.memory_space<vmem>>, vector<1x128xf32>,
    return
  }
  func.func @transform_0(%arg0: i32) -> (i32, i32) {
    %c0_i32 = arith.constant 0 : i32
    %c0_i32_0 = arith.constant 0 : i32
    return %c0_i32, %arg0 : i32, i32
  }
  func.func @transform_1(%arg0: i32) -> (i32, i32) {
    %c0_i32 = arith.constant 0 : i32
    %c0_i32_0 = arith.constant 0 : i32
    %c0_i32_1 = arith.constant 0 : i32
    return %c0_i32, %c0_i32_0 : i32, i32
  }
  func.func @transform_2(%arg0: i32) -> (i32, i32) {
    %c0_i32 = arith.constant 0 : i32
    %c0_i32_0 = arith.constant 0 : i32
    %c0_i32_1 = arith.constant 0 : i32
    return %c0_i32, %c0_i32_0 : i32, i32
  }
  func.func @transform_3(%arg0: i32) -> (i32, i32) {
    %c0_i32 = arith.constant 0 : i32
    %c0_i32_0 = arith.constant 0 : i32
    %c0_i32_1 = arith.constant 0 : i32
    return %c0_i32, %c0_i32_0 : i32, i32
  }
  func.func @transform_4(%arg0: i32) -> (i32, i32) {
    %c0_i32 = arith.constant 0 : i32
    %c0_i32_0 = arith.constant 0 : i32
    return %c0_i32, %arg0 : i32, i32
  }
}

</mosaic_0001>

<llo_original>
// kernel: energy_model_forward_t.1
$region0: #{energy_model_forward_t.1}
  #allocation0 [shape = 'u32[]', space=smem, size = 0x4, offset = 0x4, fixed_abs, tag = 'smem constant byte address 0x4 - core index']
  #allocation1 [shape = 'u32[144,128]{1,0:T(1,128)}', space=vmem, size = 0x12000, scoped, tag = 'internal scratch']
  %s0 = inlined_call_operand.vmem [shape: f32[2,128], index: 0, kind: input, shape index: {}]
  %s1 = inlined_call_operand.vmem [shape: f32[8,2], index: 1, kind: input, shape index: {}]
  %s2 = inlined_call_operand.vmem [shape: f32[8,2], index: 2, kind: input, shape index: {}]
  %s3 = inlined_call_operand.vmem [shape: f32[8,1], index: 3, kind: input, shape index: {}]
  %s4 = inlined_call_operand.vmem [shape: f32[1,128], index: 4, kind: output, shape index: {}]
  %s5 = sld [smem:[#allocation0]]
  $region26: #{energy_model_forward_t.1} parent=0
    _
  %s7 = ssub.s32 1, %s5
  %s8 = scalar_select 0, %s7, %s5
  // Predicated region
  $region2: #{energy_model_forward_t.1} parent=0 // pred_check
    _
  $region3: #{energy_model_forward_t.1} parent=0 // pred_check_branch
    %10 = sbr.rel (0) target = $region5
  $region4: #{energy_model_forward_t.1} parent=0 // pred_region
    _
  $region5: #{energy_model_forward_t.1} parent=0 // pred_fallthru
    _
  // Predicated region
  $region6: #{energy_model_forward_t.1} parent=0 // pred_check
    _
  $region7: #{energy_model_forward_t.1} parent=0 // pred_check_branch
    %12 = sbr.rel (0) target = $region9
  $region8: #{energy_model_forward_t.1} parent=0 // pred_region
    _
  $region9: #{energy_model_forward_t.1} parent=0 // pred_fallthru
    _
  // Predicated region
  $region10: #{energy_model_forward_t.1} parent=0 // pred_check
    _
  $region11: #{energy_model_forward_t.1} parent=0 // pred_check_branch
    %14 = sbr.rel (0) target = $region13
  $region12: #{energy_model_forward_t.1} parent=0 // pred_region
    _
  $region13: #{energy_model_forward_t.1} parent=0 // pred_fallthru
    _
  // Predicated region
  $region14: #{energy_model_forward_t.1} parent=0 // pred_check
    _
  $region15: #{energy_model_forward_t.1} parent=0 // pred_check_branch
    %16 = sbr.rel (0) target = $region17
  $region16: #{energy_model_forward_t.1} parent=0 // pred_region
    _
  $region17: #{energy_model_forward_t.1} parent=0 // pred_fallthru
    _
  %v17 = vld [vmem:[%s1] sm:$0xff]
  %v18 = vld [vmem:[%s2] sm:$0xff]
  %v19 = vld [vmem:[%s0] sm:$0x1]
  %v20 = vlaneseq
  %v21 = vshrl.u32 %v20, 7
  %v22 = vsub.s32 0, %v21
  %v23 = vrot.slane %v19, %v22
  %v24 = vld [vmem:[%s0 + $0x1] sm:$0x1]
  %v25 = vlaneseq
  %v26 = vshrl.u32 %v25, 7
  %v27 = vsub.s32 0, %v26
  %v28 = vrot.slane %v24, %v27
  %30 = vset.pattern.permute.xlu0 0
  %31 = vperm.xlu0 %30, %v18
  %v32 = vpop.permute.xlu0 %31
  %v34 = vsub.f32 %v23, %v32
  %35 = vset.pattern.permute.xlu0 1
  %36 = vperm.xlu0 %35, %v18
  %v37 = vpop.permute.xlu0 %36
  %v39 = vsub.f32 %v28, %v37
  %v40 = vld [vmem:[%s3] sm:$0xff]
  %v41 = vmul.f32 %v34, %v34
  %43 = vset.pattern.permute.xlu0 0
  %44 = vperm.xlu0 %43, %v17
  %v45 = vpop.permute.xlu0 %44
  %v47 = vmul.f32 %v45, %v41
  %49 = vset.pattern.permute.xlu0 0
  %50 = vperm.xlu0 %49, %v40
  %v51 = vpop.permute.xlu0 %50
  %v53 = vadd.f32 %v51, %v47
  %v54 = vmul.f32 %v39, %v39
  %55 = vset.pattern.permute.xlu0 1
  %56 = vperm.xlu0 %55, %v17
  %v57 = vpop.permute.xlu0 %56
  %v59 = vmul.f32 %v57, %v54
  %v60 = vadd.f32 %v53, %v59
  %v61 = vrot.slane %v60, 4
  %v62 = vmax.f32 %v60, %v61
  %v63 = vrot.slane %v62, 2
  %v64 = vmax.f32 %v62, %v63
  %v65 = vrot.slane %v64, 1
  %v66 = vmax.f32 %v64, %v65
  %v67 = vsub.f32 %v60, %v66
  %v68 = vmul.f32 %v67, 1.442695
  %v69 = vpow.pop %v68
  %v70 = vrot.slane %v69, 4
  %v71 = vadd.f32 %v69, %v70
  %v72 = vrot.slane %v71, 2
  %v73 = vadd.f32 %v71, %v72
  %v74 = vrot.slane %v73, 1
  %v75 = vadd.f32 %v73, %v74
  %v76 = vlog2.pop %v75
  %v77 = vmul.f32 %v76, 0.6931472
  %v78 = vadd.f32 %v66, %v77
  %v79 = vsub.f32 0.0, %v78
  %80 = vst [vmem:[%s4] sm:$0x1] %v79
  // Predicated region
  $region18: #{energy_model_forward_t.1} parent=0 // pred_check
    _
  $region19: #{energy_model_forward_t.1} parent=0 // pred_check_branch
    %82 = sbr.rel (0) target = $region21
  $region20: #{energy_model_forward_t.1} parent=0 // pred_region
    _
  $region21: #{energy_model_forward_t.1} parent=0 // pred_fallthru
    _
  // Predicated region
  $region22: #{energy_model_forward_t.1} parent=0 // pred_check
    _
  $region23: #{energy_model_forward_t.1} parent=0 // pred_check_branch
    %84 = sbr.rel (0) target = $region25
  $region24: #{energy_model_forward_t.1} parent=0 // pred_region
    _
  $region25: #{energy_model_forward_t.1} parent=0 // pred_fallthru
    _

</llo_original>
